<compile_context>
chip_gen: v7x
topology: tpu7x:2x2x1
jax: 0.10.0
libtpu: 0.0.40
codegen_flags: <defaults>
</compile_context>

<pallas_src>
import functools

import jax
import jax.numpy as jnp
from jax.experimental import pallas as pl
from jax.experimental.pallas import tpu as pltpu


_NEG_BIG = -1e30  # finite "-inf": exp underflows to 0 and 0 * (-1e30) == 0 (no NaN)


def _round_up(x, m):
    return ((x + m - 1) // m) * m


def _soft_ce_kernel(x_ref, t_ref, o_ref, m_sc, l_sc, tx_sc, ts_sc, *,
                    tb, tc, b_true, c_true, mask_rows, mask_cols):
    """One (TB, TC) tile of the streaming soft-CE reduction."""
    # --- all grid-index-derived values at top level (interpret-mode safe) ---
    bi = pl.program_id(0)
    ci = pl.program_id(1)
    nc = pl.num_programs(1)
    is_first = ci == 0
    is_last = ci == nc - 1

    @pl.when(is_first)
    def _init():
        m_sc[...] = jnp.full_like(m_sc, -jnp.inf)
        l_sc[...] = jnp.zeros_like(l_sc)
        tx_sc[...] = jnp.zeros_like(tx_sc)
        ts_sc[...] = jnp.zeros_like(ts_sc)

    # Load tiles (bf16 stays bf16 on the wire; compute/accumulate in f32).
    x = x_ref[...].astype(jnp.float32)           # (TB, TC)
    t = t_ref[...].astype(jnp.float32)           # (TB, TC)

    # In-kernel masking of the ragged last C-tile (replaces wrapper jnp.pad).
    if mask_cols:
        col = jax.lax.broadcasted_iota(jnp.int32, (1, tc), 1) + ci * tc
        col_valid = col < c_true                 # (1, TC), broadcast over rows
        x = jnp.where(col_valid, x, _NEG_BIG)
        t = jnp.where(col_valid, t, 0.0)

    # Online log-sum-exp update (row reductions -> XLU, exp -> EUP; both
    # overlap with the DMA-bound roofline for free on v5e/v6e).
    tile_max = jnp.max(x, axis=-1, keepdims=True)              # (TB, 1)
    m_prev = m_sc[...]
    m_new = jnp.maximum(m_prev, tile_max)
    alpha = jnp.exp(m_prev - m_new)
    l_sc[...] = alpha * l_sc[...] + jnp.sum(jnp.exp(x - m_new), axis=-1, keepdims=True)
    tx_sc[...] += jnp.sum(t * x, axis=-1, keepdims=True)
    ts_sc[...] += jnp.sum(t, axis=-1, keepdims=True)
    m_sc[...] = m_new

    # Row-validity mask for the ragged last B-tile (computed at top level).
    if mask_rows:
        row = jax.lax.broadcasted_iota(jnp.int32, (tb, 1), 0) + bi * tb
        row_valid = row < b_true
    else:
        row_valid = None

    @pl.when(is_last)
    def _finalize():
        lse = m_sc[...] + jnp.log(l_sc[...])                    # (TB, 1)
        per_sample = lse * ts_sc[...] - tx_sc[...]              # sum_c t*(lse - x)
        if mask_rows:
            per_sample = jnp.where(row_valid, per_sample, 0.0)
        o_ref[...] = per_sample


def soft_cross_entropy_loss(logits, target, *, tb_max=512, tc_max=2048):
    """logits, target: (B, C) float arrays. Returns a scalar float32 loss."""
    assert logits.shape == target.shape and logits.ndim == 2
    B, C = logits.shape

    # B tile: multiple of 8.  On v7x (2 TensorCores) guarantee >= 2 B-tiles
    # whenever B > 8 so the 'parallel' axis shards across both cores.
    if B > 8:
        TB = min(tb_max, _round_up(pl.cdiv(B, 2), 8))
    else:
        TB = _round_up(max(B, 1), 8)
    # C tile: lane-dense (multiple of 128); 2-4 MiB per input tile amortizes
    # the ~0.35us per-grid-step overhead while staying in the VMEM budget.
    TC = min(tc_max, _round_up(C, 128))

    nb = pl.cdiv(B, TB)
    nc = pl.cdiv(C, TC)
    mask_rows = (B % TB) != 0
    mask_cols = (C % TC) != 0

    kernel = functools.partial(
        _soft_ce_kernel, tb=TB, tc=TC, b_true=B, c_true=C,
        mask_rows=mask_rows, mask_cols=mask_cols)

    bytes_in = B * C * (logits.dtype.itemsize + target.dtype.itemsize)
    cost = pl.CostEstimate(flops=6 * B * C,
                           transcendentals=B * C,
                           bytes_accessed=bytes_in + B * 4)

    per_sample = pl.pallas_call(
        kernel,
        out_shape=jax.ShapeDtypeStruct((B, 1), jnp.float32),
        grid_spec=pltpu.PrefetchScalarGridSpec(
            num_scalar_prefetch=0,
            grid=(nb, nc),                       # C (reduction) axis last
            in_specs=[
                pl.BlockSpec((TB, TC), lambda bi, ci: (bi, ci)),
                pl.BlockSpec((TB, TC), lambda bi, ci: (bi, ci)),
            ],
            # Per-B-tile output block: no accumulator shared across the
            # 'parallel' axis -> safe to shard over v7x's two TensorCores.
            out_specs=pl.BlockSpec((TB, 1), lambda bi, ci: (bi, 0)),
            scratch_shapes=[pltpu.VMEM((TB, 1), jnp.float32)] * 4,
        ),
        compiler_params=pltpu.CompilerParams(
            dimension_semantics=("parallel", "arbitrary"),
            vmem_limit_bytes=32 * 1024 * 1024,
        ),
        cost_estimate=cost,
    )(logits, target)

    # Mean over the TRUE batch size (padded rows masked to 0 in-kernel and
    # clipped by the ragged output writeback).
    return jnp.sum(per_sample[:, 0]) / B


def _reference(logits, target):
    """Pure-JAX reference for correctness checking."""
    log_p = jax.nn.log_softmax(logits.astype(jnp.float32), axis=-1)
    return jnp.mean(jnp.sum(-log_p * target.astype(jnp.float32), axis=-1), axis=0)


if __name__ == "__main__":
    key = jax.random.PRNGKey(0)
    k1, k2, k3, k4, k5, k6 = jax.random.split(key, 6)

    # --- Test 1: tiny (batch=8, num_classes=16), single grid tile + ragged C. ---
    B1, C1 = 8, 16
    logits1 = jax.random.normal(k1, (B1, C1), dtype=jnp.float32)
    raw1 = jax.random.uniform(k2, (B1, C1), dtype=jnp.float32)
    target1 = raw1 / jnp.sum(raw1, axis=-1, keepdims=True)   # rows sum to 1

    loss1 = soft_cross_entropy_loss(logits1, target1)
    jax.block_until_ready(loss1)
    ref1 = _reference(logits1, target1)
    assert jnp.allclose(loss1, ref1, rtol=1e-5, atol=1e-5), (loss1, ref1)

    # --- Test 2: non-divisible (22, 300) with small tiles -> (3, 3) grid.
    # Exercises streaming LSE across C tiles, in-kernel row/col masking and the
    # sum(t) accumulator path (targets intentionally NOT normalized). ---
    B2, C2 = 22, 300
    logits2 = jax.random.normal(k3, (B2, C2), dtype=jnp.float32)
    target2 = jax.random.uniform(k4, (B2, C2), dtype=jnp.float32)

    loss2 = soft_cross_entropy_loss(logits2, target2, tb_max=8, tc_max=128)
    jax.block_until_ready(loss2)
    ref2 = _reference(logits2, target2)
    assert jnp.allclose(loss2, ref2, rtol=1e-4, atol=1e-4), (loss2, ref2)

    # --- Test 3: bf16 inputs, >= 2 B-tiles with default tiling (ragged B). ---
    B3, C3 = 24, 384
    logits3 = jax.random.normal(k5, (B3, C3), dtype=jnp.float32).astype(jnp.bfloat16)
    target3 = jax.random.uniform(k6, (B3, C3), dtype=jnp.float32).astype(jnp.bfloat16)

    loss3 = soft_cross_entropy_loss(logits3, target3)
    jax.block_until_ready(loss3)
    ref3 = _reference(logits3, target3)
    assert jnp.allclose(loss3, ref3, rtol=1e-4, atol=1e-4), (loss3, ref3)

    print("KERNEL_OK")
</pallas_src>

<mosaic_0001>
module attributes {stable_mosaic.version = 11 : i64} {
  func.func @_soft_ce_kernel(%arg0: i32, %arg1: i32, %arg2: memref<8x128xf32, #tpu.memory_space<vmem>>, %arg3: memref<8x128xf32, #tpu.memory_space<vmem>>, %arg4: memref<8x1xf32, #tpu.memory_space<vmem>>, %arg5: memref<8x1xf32, #tpu.memory_space<vmem>>, %arg6: memref<8x1xf32, #tpu.memory_space<vmem>>, %arg7: memref<8x1xf32, #tpu.memory_space<vmem>>, %arg8: memref<8x1xf32, #tpu.memory_space<vmem>>) attributes {dimension_semantics = [#tpu.dimension_semantics<parallel>, #tpu.dimension_semantics<arbitrary>], iteration_bounds = array<i64: 1, 1>, scalar_prefetch = 0 : i64, scratch_operands = 4 : i64, tpu.core_type = #tpu.core_type<tc>, window_params = [{transform_indices = @transform_0, window_bounds = array<i64: 8, 128>}, {transform_indices = @transform_1, window_bounds = array<i64: 8, 128>}, {transform_indices = @transform_2, window_bounds = array<i64: 8, 1>}]} {
    %c0_i32 = arith.constant 0 : i32
    %0 = arith.cmpi eq, %arg1, %c0_i32 : i32
    %c0_i32_0 = arith.constant 0 : i32
    %1 = arith.cmpi eq, %arg1, %c0_i32_0 : i32
    %2 = arith.extui %0 : i1 to i32
    %c0_i32_1 = arith.constant 0 : i32
    %3 = arith.cmpi ne, %2, %c0_i32_1 : i32
    scf.if %3 {
      %cst_27 = arith.constant 0xFF800000 : f32
      %49 = vector.broadcast %cst_27 : f32 to vector<8x1xf32>
      %c0_28 = arith.constant 0 : index
      %c0_29 = arith.constant 0 : index
      %50 = vector.load %arg5[%c0_28, %c0_29] : memref<8x1xf32, #tpu.memory_space<vmem>>, vector<8x1xf32>
      tpu.vector_store %arg5[%c0_28, %c0_29], %49 {strides = array<i32>} : memref<8x1xf32, #tpu.memory_space<vmem>>, vector<8x1xf32>,
      %cst_30 = arith.constant 0.000000e+00 : f32
      %51 = vector.broadcast %cst_30 : f32 to vector<8x1xf32>
      %c0_31 = arith.constant 0 : index
      %c0_32 = arith.constant 0 : index
      %52 = vector.load %arg6[%c0_31, %c0_32] : memref<8x1xf32, #tpu.memory_space<vmem>>, vector<8x1xf32>
      tpu.vector_store %arg6[%c0_31, %c0_32], %51 {strides = array<i32>} : memref<8x1xf32, #tpu.memory_space<vmem>>, vector<8x1xf32>,
      %cst_33 = arith.constant 0.000000e+00 : f32
      %53 = vector.broadcast %cst_33 : f32 to vector<8x1xf32>
      %c0_34 = arith.constant 0 : index
      %c0_35 = arith.constant 0 : index
      %54 = vector.load %arg7[%c0_34, %c0_35] : memref<8x1xf32, #tpu.memory_space<vmem>>, vector<8x1xf32>
      tpu.vector_store %arg7[%c0_34, %c0_35], %53 {strides = array<i32>} : memref<8x1xf32, #tpu.memory_space<vmem>>, vector<8x1xf32>,
      %cst_36 = arith.constant 0.000000e+00 : f32
      %55 = vector.broadcast %cst_36 : f32 to vector<8x1xf32>
      %c0_37 = arith.constant 0 : index
      %c0_38 = arith.constant 0 : index
      %56 = vector.load %arg8[%c0_37, %c0_38] : memref<8x1xf32, #tpu.memory_space<vmem>>, vector<8x1xf32>
      tpu.vector_store %arg8[%c0_37, %c0_38], %55 {strides = array<i32>} : memref<8x1xf32, #tpu.memory_space<vmem>>, vector<8x1xf32>,
    } else {
    }
    %c0 = arith.constant 0 : index
    %c0_2 = arith.constant 0 : index
    %4 = vector.load %arg2[%c0, %c0_2] : memref<8x128xf32, #tpu.memory_space<vmem>>, vector<8x128xf32>
    %c0_3 = arith.constant 0 : index
    %c0_4 = arith.constant 0 : index
    %5 = vector.load %arg3[%c0_3, %c0_4] : memref<8x128xf32, #tpu.memory_space<vmem>>, vector<8x128xf32>
    %6 = tpu.iota {dimensions = array<i32: 1>} : vector<1x128xi32>
    %c128_i32 = arith.constant 128 : i32
    %7 = arith.muli %arg1, %c128_i32 : i32
    %8 = vector.broadcast %7 : i32 to vector<1x128xi32>
    %9 = arith.addi %6, %8 : vector<1x128xi32>
    %c16_i32 = arith.constant 16 : i32
    %10 = vector.broadcast %c16_i32 : i32 to vector<1x128xi32>
    %11 = arith.cmpi slt, %9, %10 : vector<1x128xi32>
    %cst = arith.constant -1.000000e+30 : f32
    %12 = vector.shape_cast %11 : vector<1x128xi1> to vector<1x128xi1>
    %13 = vector.broadcast %12 : vector<1x128xi1> to vector<8x128xi1>
    %14 = vector.broadcast %cst : f32 to vector<8x128xf32>
    %15 = arith.select %13, %4, %14 : vector<8x128xi1>, vector<8x128xf32>
    %cst_5 = arith.constant 0.000000e+00 : f32
    %16 = vector.shape_cast %11 : vector<1x128xi1> to vector<1x128xi1>
    %17 = vector.broadcast %16 : vector<1x128xi1> to vector<8x128xi1>
    %18 = vector.broadcast %cst_5 : f32 to vector<8x128xf32>
    %19 = arith.select %17, %5, %18 : vector<8x128xi1>, vector<8x128xf32>
    %cst_6 = arith.constant dense<0xFF800000> : vector<8xf32>
    %20 = vector.multi_reduction <maximumf>, %15, %cst_6 [1] : vector<8x128xf32> to vector<8xf32>
    %21 = vector.shape_cast %20 : vector<8xf32> to vector<8x1xf32>
    %c0_7 = arith.constant 0 : index
    %c0_8 = arith.constant 0 : index
    %22 = vector.load %arg5[%c0_7, %c0_8] : memref<8x1xf32, #tpu.memory_space<vmem>>, vector<8x1xf32>
    %23 = arith.maximumf %22, %21 : vector<8x1xf32>
    %24 = arith.subf %22, %23 : vector<8x1xf32>
    %25 = math.exp %24 : vector<8x1xf32>
    %c0_9 = arith.constant 0 : index
    %c0_10 = arith.constant 0 : index
    %26 = vector.load %arg6[%c0_9, %c0_10] : memref<8x1xf32, #tpu.memory_space<vmem>>, vector<8x1xf32>
    %27 = arith.mulf %25, %26 : vector<8x1xf32>
    %28 = vector.broadcast %23 : vector<8x1xf32> to vector<8x128xf32>
    %29 = arith.subf %15, %28 : vector<8x128xf32>
    %30 = math.exp %29 : vector<8x128xf32>
    %cst_11 = arith.constant dense<0.000000e+00> : vector<8xf32>
    %31 = vector.multi_reduction <add>, %30, %cst_11 [1] : vector<8x128xf32> to vector<8xf32>
    %32 = vector.shape_cast %31 : vector<8xf32> to vector<8x1xf32>
    %33 = arith.addf %27, %32 : vector<8x1xf32>
    %c0_12 = arith.constant 0 : index
    %c0_13 = arith.constant 0 : index
    %34 = vector.load %arg6[%c0_12, %c0_13] : memref<8x1xf32, #tpu.memory_space<vmem>>, vector<8x1xf32>
    tpu.vector_store %arg6[%c0_12, %c0_13], %33 {strides = array<i32>} : memref<8x1xf32, #tpu.memory_space<vmem>>, vector<8x1xf32>,
    %c0_14 = arith.constant 0 : index
    %c0_15 = arith.constant 0 : index
    %35 = vector.load %arg7[%c0_14, %c0_15] : memref<8x1xf32, #tpu.memory_space<vmem>>, vector<8x1xf32>
    %36 = arith.mulf %19, %15 : vector<8x128xf32>
    %cst_16 = arith.constant dense<0.000000e+00> : vector<8xf32>
    %37 = vector.multi_reduction <add>, %36, %cst_16 [1] : vector<8x128xf32> to vector<8xf32>
    %38 = vector.shape_cast %37 : vector<8xf32> to vector<8x1xf32>
    %39 = arith.addf %35, %38 : vector<8x1xf32>
    %c0_17 = arith.constant 0 : index
    %c0_18 = arith.constant 0 : index
    %40 = vector.load %arg7[%c0_17, %c0_18] : memref<8x1xf32, #tpu.memory_space<vmem>>, vector<8x1xf32>
    tpu.vector_store %arg7[%c0_17, %c0_18], %39 {strides = array<i32>} : memref<8x1xf32, #tpu.memory_space<vmem>>, vector<8x1xf32>,
    %c0_19 = arith.constant 0 : index
    %c0_20 = arith.constant 0 : index
    %41 = vector.load %arg8[%c0_19, %c0_20] : memref<8x1xf32, #tpu.memory_space<vmem>>, vector<8x1xf32>
    %cst_21 = arith.constant dense<0.000000e+00> : vector<8xf32>
    %42 = vector.multi_reduction <add>, %19, %cst_21 [1] : vector<8x128xf32> to vector<8xf32>
    %43 = vector.shape_cast %42 : vector<8xf32> to vector<8x1xf32>
    %44 = arith.addf %41, %43 : vector<8x1xf32>
    %c0_22 = arith.constant 0 : index
    %c0_23 = arith.constant 0 : index
    %45 = vector.load %arg8[%c0_22, %c0_23] : memref<8x1xf32, #tpu.memory_space<vmem>>, vector<8x1xf32>
    tpu.vector_store %arg8[%c0_22, %c0_23], %44 {strides = array<i32>} : memref<8x1xf32, #tpu.memory_space<vmem>>, vector<8x1xf32>,
    %c0_24 = arith.constant 0 : index
    %c0_25 = arith.constant 0 : index
    %46 = vector.load %arg5[%c0_24, %c0_25] : memref<8x1xf32, #tpu.memory_space<vmem>>, vector<8x1xf32>
    tpu.vector_store %arg5[%c0_24, %c0_25], %23 {strides = array<i32>} : memref<8x1xf32, #tpu.memory_space<vmem>>, vector<8x1xf32>,
    %47 = arith.extui %1 : i1 to i32
    %c0_i32_26 = arith.constant 0 : i32
    %48 = arith.cmpi ne, %47, %c0_i32_26 : i32
    scf.if %48 {
      %c0_27 = arith.constant 0 : index
      %c0_28 = arith.constant 0 : index
      %49 = vector.load %arg5[%c0_27, %c0_28] : memref<8x1xf32, #tpu.memory_space<vmem>>, vector<8x1xf32>
      %c0_29 = arith.constant 0 : index
      %c0_30 = arith.constant 0 : index
      %50 = vector.load %arg6[%c0_29, %c0_30] : memref<8x1xf32, #tpu.memory_space<vmem>>, vector<8x1xf32>
      %51 = math.log %50 : vector<8x1xf32>
      %52 = arith.addf %49, %51 : vector<8x1xf32>
      %c0_31 = arith.constant 0 : index
      %c0_32 = arith.constant 0 : index
      %53 = vector.load %arg8[%c0_31, %c0_32] : memref<8x1xf32, #tpu.memory_space<vmem>>, vector<8x1xf32>
      %54 = arith.mulf %52, %53 : vector<8x1xf32>
      %c0_33 = arith.constant 0 : index
      %c0_34 = arith.constant 0 : index
      %55 = vector.load %arg7[%c0_33, %c0_34] : memref<8x1xf32, #tpu.memory_space<vmem>>, vector<8x1xf32>
      %56 = arith.subf %54, %55 : vector<8x1xf32>
      %c0_35 = arith.constant 0 : index
      %c0_36 = arith.constant 0 : index
      %57 = vector.load %arg4[%c0_35, %c0_36] : memref<8x1xf32, #tpu.memory_space<vmem>>, vector<8x1xf32>
      tpu.vector_store %arg4[%c0_35, %c0_36], %56 {strides = array<i32>} : memref<8x1xf32, #tpu.memory_space<vmem>>, vector<8x1xf32>,
    } else {
    }
    return
  }
  func.func @transform_0(%arg0: i32, %arg1: i32) -> (i32, i32) {
    %c0_i32 = arith.constant 0 : i32
    return %arg0, %arg1 : i32, i32
  }
  func.func @transform_1(%arg0: i32, %arg1: i32) -> (i32, i32) {
    %c0_i32 = arith.constant 0 : i32
    return %arg0, %arg1 : i32, i32
  }
  func.func @transform_2(%arg0: i32, %arg1: i32) -> (i32, i32) {
    %c0_i32 = arith.constant 0 : i32
    %c0_i32_0 = arith.constant 0 : i32
    return %arg0, %c0_i32 : i32, i32
  }
}

</mosaic_0001>

<llo_original>
// kernel: tpu_custom_call.1
$region0: #{tpu_custom_call.1}
  #allocation0 [shape = 'u32[]', space=smem, size = 0x4, offset = 0x4, fixed_abs, tag = 'smem constant byte address 0x4 - core index']
  #allocation1 [shape = 'u32[144,128]{1,0:T(1,128)}', space=vmem, size = 0x12000, scoped, tag = 'internal scratch']
  #allocation2 [shape = 'f32[8,1]{1,0:T(8,128)}', space=vmem, size = 0x1000, scoped, tag = 'scratch operand']
  #allocation3 [shape = 'f32[8,1]{1,0:T(8,128)}', space=vmem, size = 0x1000, scoped, tag = 'scratch operand']
  #allocation4 [shape = 'f32[8,1]{1,0:T(8,128)}', space=vmem, size = 0x1000, scoped, tag = 'scratch operand']
  #allocation5 [shape = 'f32[8,1]{1,0:T(8,128)}', space=vmem, size = 0x1000, scoped, tag = 'scratch operand']
  %s0 = inlined_call_operand.hbm [shape: f32[8,16], index: 0, kind: input, shape index: {}]
  %s1 = inlined_call_operand.hbm [shape: f32[8,16], index: 1, kind: input, shape index: {}]
  %s2 = inlined_call_operand.vmem [shape: f32[8,1], index: 2, kind: output, shape index: {}]
  %s3 = sld [smem:[#allocation0]]
  $region34: #{tpu_custom_call.1} parent=0
    _
  %s5 = ssub.s32 1, %s3
  %s6 = scalar_select 0, %s5, %s3
  $region1: #{tpu_custom_call.1} parent=0
    #allocation6 [shape = 'u8[4096]{0}', space=vmem, size = 0x1000, scoped, tag = 'input window, operand 0, single buffered']
    #allocation7 [shape = 's32[1]{0}', space=sflag, size = 0x4, scoped, tag = 'scoped memory for tpu_custom_call.1']
    #allocation8 [shape = 'u8[4096]{0}', space=vmem, size = 0x1000, scoped, tag = 'input window, operand 1, single buffered']
    #allocation9 [shape = 's32[1]{0}', space=sflag, size = 0x4, scoped, tag = 'scoped memory for tpu_custom_call.1']
    %7 = vsyncpa [#allocation7], 0
    %8 = vsyncpa [#allocation9], 0
    // Predicated region
    $region2: #{tpu_custom_call.1} parent=1 // pred_check
      _
    $region3: #{tpu_custom_call.1} parent=1 // pred_check_branch
      %10 = sbr.rel (0) target = $region5
    $region4: #{tpu_custom_call.1} parent=1 // pred_region
      %s12 = ssub.s32 128, 128
      %13 = vsyncadd [#allocation7], %s12
      %s15 = sshll.u32 [#allocation6], 4
      %s16 = int_to_ptr.vmem [resolvable:$true] %s15
      %18 = dma.hbm_to_vmem [thread:$0]  %s0, 128, %s16, [#allocation7]
    $region5: #{tpu_custom_call.1} parent=1 // pred_fallthru
      _
    // Predicated region
    $region6: #{tpu_custom_call.1} parent=1 // pred_check
      _
    $region7: #{tpu_custom_call.1} parent=1 // pred_check_branch
      %20 = sbr.rel (0) target = $region9
    $region8: #{tpu_custom_call.1} parent=1 // pred_region
      %s22 = ssub.s32 128, 128
      %23 = vsyncadd [#allocation9], %s22
      %s25 = sshll.u32 [#allocation8], 4
      %s26 = int_to_ptr.vmem [resolvable:$true] %s25
      %28 = dma.hbm_to_vmem [thread:$0]  %s1, 128, %s26, [#allocation9]
    $region9: #{tpu_custom_call.1} parent=1 // pred_fallthru
      _
    // Predicated region
    $region10: #{tpu_custom_call.1} parent=1 // pred_check
      _
    $region11: #{tpu_custom_call.1} parent=1 // pred_check_branch
      %30 = sbr.rel (0) target = $region13
    $region12: #{tpu_custom_call.1} parent=1 // pred_region
      %31 = dma.done [#allocation7], 128
    $region13: #{tpu_custom_call.1} parent=1 // pred_fallthru
      _
    // Predicated region
    $region14: #{tpu_custom_call.1} parent=1 // pred_check
      _
    $region15: #{tpu_custom_call.1} parent=1 // pred_check_branch
      %33 = sbr.rel (0) target = $region17
    $region16: #{tpu_custom_call.1} parent=1 // pred_region
      %34 = dma.done [#allocation9], 128
    $region17: #{tpu_custom_call.1} parent=1 // pred_fallthru
      _
    %p35 = scmp.eq.s32.totalorder 0, 0
    // Predicated region
    $region18: #{tpu_custom_call.1} parent=1 // pred_check
      %p36 = pneg %p35
    $region19: #{tpu_custom_call.1} parent=1 // pred_check_branch
      %38 = sbr.rel (%p36) target = $region21
    $region20: #{tpu_custom_call.1} parent=1 // pred_region
      %vm39 = vcmask 7168
      %40 = vst.msk [vmem:[#allocation2] sm:$0xff] %vm39, -inf
      %41 = vst.msk [vmem:[#allocation3] sm:$0xff] %vm39, 0.0
      %42 = vst.msk [vmem:[#allocation4] sm:$0xff] %vm39, 0.0
      %43 = vst.msk [vmem:[#allocation5] sm:$0xff] %vm39, 0.0
    $region21: #{tpu_custom_call.1} parent=1 // pred_fallthru
      _
    %v44 = vld [vmem:[#allocation6] sm:$0xff]
    %v45 = vld [vmem:[#allocation8] sm:$0xff]
    %v46 = vlaneseq
    %v47 = vand.u32 %v46, 127
    %s48 = smul.u32 0, 128
    %v49 = vstv %s48
    %v50 = vadd.s32 %v47, %v49
    %vm51 = vcmp.lt.s32.totalorder %v50, 16
    %v52 = vsel %vm51, 1, 0
    %vm53 = vcmp.eq.s32.totalorder %v52, 1
    %v54 = vsel %vm53, %v44, -1e+30
    %v55 = vsel %vm53, %v45, 0.0
    %56 = vmax.xlane.f32.xlu0 %v54
    %v57 = vpop.xlane.xlu0 %56
    %v58 = vld [vmem:[#allocation2] sm:$0xff]
    %v59 = vmax.f32 %v58, %v57
    %v60 = vsub.f32 %v58, %v59
    %v61 = vmul.f32 %v60, 1.442695
    %v62 = vpow.pop %v61
    %v63 = vld [vmem:[#allocation3] sm:$0xff]
    %v64 = vmul.f32 %v62, %v63
    %66 = vset.pattern.permute.xlu0 0
    %67 = vperm.xlu0 %66, %v59
    %v68 = vpop.permute.xlu0 %67
    %v70 = vsub.f32 %v54, %v68
    %v71 = vmul.f32 %v70, 1.442695
    %v72 = vpow.pop %v71
    %73 = vadd.xlane.f32.xlu0 %v72
    %v74 = vpop.xlane.xlu0 %73
    %v75 = vadd.f32 %v64, %v74
    %vm76 = vcmask 7168
    %77 = vst.msk [vmem:[#allocation3] sm:$0xff] %vm76, %v75
    %v78 = vld [vmem:[#allocation4] sm:$0xff]
    %v79 = vmul.f32 %v55, %v54
    %80 = vadd.xlane.f32.xlu0 %v79
    %v81 = vpop.xlane.xlu0 %80
    %v82 = vadd.f32 %v78, %v81
    %83 = vst.msk [vmem:[#allocation4] sm:$0xff] %vm76, %v82
    %v84 = vld [vmem:[#allocation5] sm:$0xff]
    %85 = vadd.xlane.f32.xlu0 %v55
    %v86 = vpop.xlane.xlu0 %85
    %v87 = vadd.f32 %v84, %v86
    %88 = vst.msk [vmem:[#allocation5] sm:$0xff] %vm76, %v87
    %89 = vst.msk [vmem:[#allocation2] sm:$0xff] %vm76, %v59
    // Predicated region
    $region22: #{tpu_custom_call.1} parent=1 // pred_check
      %p90 = pneg %p35
    $region23: #{tpu_custom_call.1} parent=1 // pred_check_branch
      %92 = sbr.rel (%p90) target = $region25
    $region24: #{tpu_custom_call.1} parent=1 // pred_region
      %v93 = vld [vmem:[#allocation2] sm:$0xff]
      %v94 = vld [vmem:[#allocation3] sm:$0xff]
      %v95 = vlog2.pop %v94
      %v96 = vmul.f32 %v95, 0.6931472
      %v97 = vadd.f32 %v93, %v96
      %v98 = vld [vmem:[#allocation5] sm:$0xff]
      %v99 = vmul.f32 %v97, %v98
      %v100 = vld [vmem:[#allocation4] sm:$0xff]
      %v101 = vsub.f32 %v99, %v100
      %102 = vst.msk [vmem:[%s2] sm:$0xff] %vm76, %v101
    $region25: #{tpu_custom_call.1} parent=1 // pred_fallthru
      _
    // Predicated region
    $region26: #{tpu_custom_call.1} parent=1 // pred_check
      _
    $region27: #{tpu_custom_call.1} parent=1 // pred_check_branch
      %104 = sbr.rel (0) target = $region29
    $region28: #{tpu_custom_call.1} parent=1 // pred_region
      _
    $region29: #{tpu_custom_call.1} parent=1 // pred_fallthru
      _
    // Predicated region
    $region30: #{tpu_custom_call.1} parent=1 // pred_check
      _
    $region31: #{tpu_custom_call.1} parent=1 // pred_check_branch
      %106 = sbr.rel (0) target = $region33
    $region32: #{tpu_custom_call.1} parent=1 // pred_region
      _
    $region33: #{tpu_custom_call.1} parent=1 // pred_fallthru
      _
    %107 = vsyncpa [#allocation7], 1
    %108 = vsyncpa [#allocation9], 1

</llo_original>
